<compile_context>
chip_gen: v7x
topology: tpu7x:2x2x1
jax: 0.10.0
libtpu: 0.0.40
codegen_flags: <defaults>
</compile_context>

<pallas_src>
import jax
import jax.numpy as jnp
from jax import lax
from jax.experimental import pallas as pl
from jax.experimental.pallas import tpu as pltpu

block_size = 8
n_embd = 32
vocab_size = 65  # e.g. tiny-shakespeare char vocab; synthetic here

_HIGH = lax.Precision.HIGHEST


def bigram_kernel(idx_ref, tgt_ref, fused_ref, posb_ref,
                  logits_ref, loss_ref, x_scratch):
    tile_bt, Vp = logits_ref.shape
    base = pl.program_id(0) * tile_bt      # first row of this block

    # --- token "embedding @ W^T" as a row gather from the fused table -------
    # idx lives in SMEM (scalar prefetch); each row is a dynamic (1, Vp)
    # sublane-slice load from the VMEM-resident fused table.
    def gather_row(r):
        tok = idx_ref[base + r]                                   # SMEM scalar
        x_scratch[pl.ds(r, 1), :] = fused_ref[pl.ds(tok, 1), :]

    if tile_bt <= 64:                       # short static trip count: unroll
        for r in range(tile_bt):
            gather_row(r)
    else:                                   # keep code size bounded at scale
        @pl.loop(0, tile_bt)
        def _(r):
            gather_row(r)

    # --- add the (pos @ W^T + b) slab (pre-tiled; padded lanes are -1e30) ---
    logits = x_scratch[...] + posb_ref[...]
    logits_ref[...] = logits                # single lane-dense store

    # --- cross entropy: padded lanes drop out of the LSE via the baked mask -
    m = jnp.max(logits, axis=-1, keepdims=True)
    lse = jnp.log(jnp.sum(jnp.exp(logits - m), axis=-1, keepdims=True)) + m
    col = lax.broadcasted_iota(jnp.int32, (tile_bt, Vp), 1)
    picked = jnp.sum(jnp.where(col == tgt_ref[...], logits, 0.0),
                     axis=-1, keepdims=True)
    # Per-block scalar partial sum of the NLL (mean is finished in the wrapper).
    loss_ref[...] = jnp.sum(lse - picked, axis=0, keepdims=True)   # (1, 1)


def bigram_forward(idx, targets, tok_table, pos_table, lm_w, lm_b):
    """Pallas equivalent of BiagramLanguageModel.forward(idx, targets)."""
    B, T = idx.shape
    BT = B * T
    V, C = tok_table.shape
    Vp = 128 * pl.cdiv(V, 128)              # lane-padded vocab

    idx_flat = idx.reshape(BT).astype(jnp.int32)       # scalar-prefetch ids
    tgt_flat = targets.reshape(BT, 1).astype(jnp.int32)

    # Fold both contractions once in the wrapper:
    #   fused[v, :] = tok_table[v] @ W^T              (Vp, Vp)
    #   posb[t, :]  = pos_table[t] @ W^T + b          (T,  Vp)
    # Vocab lanes are padded to 128; the padded lanes of posb carry -1e30 so
    # they fall out of the in-kernel LSE with no extra masking.
    tok_pad = jnp.zeros((Vp, C), jnp.float32).at[:V, :].set(
        tok_table.astype(jnp.float32))
    w_pad = jnp.zeros((C, Vp), jnp.float32).at[:, :V].set(
        lm_w.T.astype(jnp.float32))
    b_pad = jnp.full((1, Vp), -1e30, jnp.float32).at[:, :V].set(
        lm_b.astype(jnp.float32)[None, :])
    fused = jnp.dot(tok_pad, w_pad, precision=_HIGH,
                    preferred_element_type=jnp.float32)
    posb = jnp.dot(pos_table[:T].astype(jnp.float32), w_pad, precision=_HIGH,
                   preferred_element_type=jnp.float32) + b_pad       # (T, Vp)

    # Size-aware grid split: only shard across 2 row blocks (v7x's 2 TCs) when
    # each shard still has >= 256 rows, covers whole sequences and stays
    # sublane (8) aligned; otherwise a single grid step avoids per-step
    # overhead and duplicated DMAs of the fused table.
    half = BT // 2
    num_blocks = 2 if (BT % 2 == 0 and half >= 256 and half % T == 0
                       and half % 8 == 0) else 1
    tile_bt = BT // num_blocks
    assert tile_bt % T == 0, "row blocks must cover whole sequences"

    # Pre-tile the position+bias slab to the block height (wrapper-side layout;
    # every row block covers whole sequences so the slab is block-invariant).
    posb_tiled = jnp.tile(posb, (tile_bt // T, 1))                   # (tile_bt, Vp)

    grid_spec = pltpu.PrefetchScalarGridSpec(
        num_scalar_prefetch=1,                                 # idx -> SMEM
        grid=(num_blocks,),
        in_specs=[
            pl.BlockSpec((tile_bt, 1), lambda i, ids: (i, 0)),     # targets
            pl.BlockSpec((Vp, Vp), lambda i, ids: (0, 0)),         # fused table
            pl.BlockSpec((tile_bt, Vp), lambda i, ids: (0, 0)),    # pos+bias slab
        ],
        out_specs=[
            pl.BlockSpec((tile_bt, Vp), lambda i, ids: (i, 0)),    # padded logits
            pl.BlockSpec((1, 1), lambda i, ids: (i, 0)),           # per-block NLL sum
        ],
        scratch_shapes=[pltpu.VMEM((tile_bt, Vp), jnp.float32)],
    )

    logits_pad, nll_sums = pl.pallas_call(
        bigram_kernel,
        out_shape=(jax.ShapeDtypeStruct((BT, Vp), jnp.float32),
                   jax.ShapeDtypeStruct((num_blocks, 1), jnp.float32)),
        grid_spec=grid_spec,
        compiler_params=pltpu.CompilerParams(
            dimension_semantics=("parallel",)),
    )(idx_flat, tgt_flat, fused, posb_tiled)

    # TODO(synk): at realistic sizes (V~50k, BT>=4k) the (Vp,Vp) fused table no
    # longer fits VMEM (esp. v7x's 64 MiB); switch to a vocab-tiled K=32
    # projection (x_block @ W_tile) with online LSE across vocab tiles,
    # Buffered(1) on grid-invariant inputs and an explicit vmem_limit_bytes.
    logits = logits_pad[:, :V]          # padded lanes hold -1e30; sliced off
    loss = jnp.sum(nll_sums) / BT       # F.cross_entropy mean reduction
    return logits, loss


def bigram_forward_ref(idx, targets, tok_table, pos_table, lm_w, lm_b):
    """Plain-JAX reference for validation (matches the PyTorch forward)."""
    B, T = idx.shape
    tok_emb = tok_table[idx]                          # (B, T, C)
    pos_emb = pos_table[jnp.arange(T)]                # (T, C)
    x = tok_emb + pos_emb[None, :, :]
    logits = jnp.dot(x, lm_w.T, precision=_HIGH) + lm_b    # (B, T, V)
    logits = logits.reshape(B * T, -1)
    tgt = targets.reshape(-1)
    lse = jax.scipy.special.logsumexp(logits, axis=-1)
    picked = logits[jnp.arange(logits.shape[0]), tgt]
    loss = jnp.mean(lse - picked)
    return logits, loss


if __name__ == "__main__":
    key = jax.random.PRNGKey(0)
    k1, k2, k3, k4, k5, k6 = jax.random.split(key, 6)

    # Deterministic parameter init (shapes per the module's __init__).
    tok_table = jax.random.normal(k1, (vocab_size, n_embd), jnp.float32)
    pos_table = jax.random.normal(k2, (block_size, n_embd), jnp.float32)
    bound = 1.0 / jnp.sqrt(n_embd)
    lm_w = jax.random.uniform(k3, (vocab_size, n_embd), jnp.float32, -bound, bound)
    lm_b = jax.random.uniform(k4, (vocab_size,), jnp.float32, -bound, bound)

    # Small example inputs: B=2, T=block_size=8.
    B, T = 2, block_size
    idx = jax.random.randint(k5, (B, T), 0, vocab_size, jnp.int32)
    targets = jax.random.randint(k6, (B, T), 0, vocab_size, jnp.int32)

    logits, loss = bigram_forward(idx, targets, tok_table, pos_table, lm_w, lm_b)
    jax.block_until_ready((logits, loss))

    # Sanity check against the pure-JAX reference.
    ref_logits, ref_loss = bigram_forward_ref(idx, targets, tok_table, pos_table,
                                              lm_w, lm_b)
    assert jnp.allclose(logits, ref_logits, atol=1e-4, rtol=1e-4)
    assert jnp.allclose(loss, ref_loss, atol=1e-4, rtol=1e-4)

    print("KERNEL_OK")
</pallas_src>

<mosaic_0001>
module attributes {stable_mosaic.version = 11 : i64} {
  func.func @bigram_kernel(%arg0: i32, %arg1: memref<16xi32, #tpu.memory_space<smem>>, %arg2: memref<16x1xi32, #tpu.memory_space<vmem>>, %arg3: memref<128x128xf32, #tpu.memory_space<vmem>>, %arg4: memref<16x128xf32, #tpu.memory_space<vmem>>, %arg5: memref<16x128xf32, #tpu.memory_space<vmem>>, %arg6: memref<1x1xf32, #tpu.memory_space<vmem>>, %arg7: memref<16x128xf32, #tpu.memory_space<vmem>>) attributes {dimension_semantics = [#tpu.dimension_semantics<parallel>], iteration_bounds = array<i64: 1>, scalar_prefetch = 1 : i64, scratch_operands = 1 : i64, tpu.core_type = #tpu.core_type<tc>, window_params = [{transform_indices = @transform_0, window_bounds = array<i64: 16, 1>}, {pipeline_mode = #tpu.pipeline_mode<synchronous>, transform_indices = @transform_1, window_bounds = array<i64: 128, 128>}, {pipeline_mode = #tpu.pipeline_mode<synchronous>, transform_indices = @transform_2, window_bounds = array<i64: 16, 128>}, {transform_indices = @transform_3, window_bounds = array<i64: 16, 128>}, {transform_indices = @transform_4, window_bounds = array<i64: 1, 1>}]} {
    %c16_i32 = arith.constant 16 : i32
    %0 = arith.muli %arg0, %c16_i32 : i32
    %c0_i32 = arith.constant 0 : i32
    %1 = arith.addi %0, %c0_i32 : i32
    %2 = arith.index_cast %1 : i32 to index
    %3 = memref.load %arg1[%2] : memref<16xi32, #tpu.memory_space<smem>>
    %4 = arith.index_cast %3 : i32 to index
    %c0 = arith.constant 0 : index
    %5 = vector.load %arg3[%4, %c0] : memref<128x128xf32, #tpu.memory_space<vmem>>, vector<1x128xf32>
    %c0_0 = arith.constant 0 : index
    %c0_1 = arith.constant 0 : index
    %6 = vector.load %arg7[%c0_0, %c0_1] : memref<16x128xf32, #tpu.memory_space<vmem>>, vector<1x128xf32>
    tpu.vector_store %arg7[%c0_0, %c0_1], %5 {strides = array<i32>} : memref<16x128xf32, #tpu.memory_space<vmem>>, vector<1x128xf32>,
    %c1_i32 = arith.constant 1 : i32
    %7 = arith.addi %0, %c1_i32 : i32
    %8 = arith.index_cast %7 : i32 to index
    %9 = memref.load %arg1[%8] : memref<16xi32, #tpu.memory_space<smem>>
    %10 = arith.index_cast %9 : i32 to index
    %c0_2 = arith.constant 0 : index
    %11 = vector.load %arg3[%10, %c0_2] : memref<128x128xf32, #tpu.memory_space<vmem>>, vector<1x128xf32>
    %c1 = arith.constant 1 : index
    %c0_3 = arith.constant 0 : index
    %12 = vector.load %arg7[%c1, %c0_3] : memref<16x128xf32, #tpu.memory_space<vmem>>, vector<1x128xf32>
    tpu.vector_store %arg7[%c1, %c0_3], %11 {strides = array<i32>} : memref<16x128xf32, #tpu.memory_space<vmem>>, vector<1x128xf32>,
    %c2_i32 = arith.constant 2 : i32
    %13 = arith.addi %0, %c2_i32 : i32
    %14 = arith.index_cast %13 : i32 to index
    %15 = memref.load %arg1[%14] : memref<16xi32, #tpu.memory_space<smem>>
    %16 = arith.index_cast %15 : i32 to index
    %c0_4 = arith.constant 0 : index
    %17 = vector.load %arg3[%16, %c0_4] : memref<128x128xf32, #tpu.memory_space<vmem>>, vector<1x128xf32>
    %c2 = arith.constant 2 : index
    %c0_5 = arith.constant 0 : index
    %18 = vector.load %arg7[%c2, %c0_5] : memref<16x128xf32, #tpu.memory_space<vmem>>, vector<1x128xf32>
    tpu.vector_store %arg7[%c2, %c0_5], %17 {strides = array<i32>} : memref<16x128xf32, #tpu.memory_space<vmem>>, vector<1x128xf32>,
    %c3_i32 = arith.constant 3 : i32
    %19 = arith.addi %0, %c3_i32 : i32
    %20 = arith.index_cast %19 : i32 to index
    %21 = memref.load %arg1[%20] : memref<16xi32, #tpu.memory_space<smem>>
    %22 = arith.index_cast %21 : i32 to index
    %c0_6 = arith.constant 0 : index
    %23 = vector.load %arg3[%22, %c0_6] : memref<128x128xf32, #tpu.memory_space<vmem>>, vector<1x128xf32>
    %c3 = arith.constant 3 : index
    %c0_7 = arith.constant 0 : index
    %24 = vector.load %arg7[%c3, %c0_7] : memref<16x128xf32, #tpu.memory_space<vmem>>, vector<1x128xf32>
    tpu.vector_store %arg7[%c3, %c0_7], %23 {strides = array<i32>} : memref<16x128xf32, #tpu.memory_space<vmem>>, vector<1x128xf32>,
    %c4_i32 = arith.constant 4 : i32
    %25 = arith.addi %0, %c4_i32 : i32
    %26 = arith.index_cast %25 : i32 to index
    %27 = memref.load %arg1[%26] : memref<16xi32, #tpu.memory_space<smem>>
    %28 = arith.index_cast %27 : i32 to index
    %c0_8 = arith.constant 0 : index
    %29 = vector.load %arg3[%28, %c0_8] : memref<128x128xf32, #tpu.memory_space<vmem>>, vector<1x128xf32>
    %c4 = arith.constant 4 : index
    %c0_9 = arith.constant 0 : index
    %30 = vector.load %arg7[%c4, %c0_9] : memref<16x128xf32, #tpu.memory_space<vmem>>, vector<1x128xf32>
    tpu.vector_store %arg7[%c4, %c0_9], %29 {strides = array<i32>} : memref<16x128xf32, #tpu.memory_space<vmem>>, vector<1x128xf32>,
    %c5_i32 = arith.constant 5 : i32
    %31 = arith.addi %0, %c5_i32 : i32
    %32 = arith.index_cast %31 : i32 to index
    %33 = memref.load %arg1[%32] : memref<16xi32, #tpu.memory_space<smem>>
    %34 = arith.index_cast %33 : i32 to index
    %c0_10 = arith.constant 0 : index
    %35 = vector.load %arg3[%34, %c0_10] : memref<128x128xf32, #tpu.memory_space<vmem>>, vector<1x128xf32>
    %c5 = arith.constant 5 : index
    %c0_11 = arith.constant 0 : index
    %36 = vector.load %arg7[%c5, %c0_11] : memref<16x128xf32, #tpu.memory_space<vmem>>, vector<1x128xf32>
    tpu.vector_store %arg7[%c5, %c0_11], %35 {strides = array<i32>} : memref<16x128xf32, #tpu.memory_space<vmem>>, vector<1x128xf32>,
    %c6_i32 = arith.constant 6 : i32
    %37 = arith.addi %0, %c6_i32 : i32
    %38 = arith.index_cast %37 : i32 to index
    %39 = memref.load %arg1[%38] : memref<16xi32, #tpu.memory_space<smem>>
    %40 = arith.index_cast %39 : i32 to index
    %c0_12 = arith.constant 0 : index
    %41 = vector.load %arg3[%40, %c0_12] : memref<128x128xf32, #tpu.memory_space<vmem>>, vector<1x128xf32>
    %c6 = arith.constant 6 : index
    %c0_13 = arith.constant 0 : index
    %42 = vector.load %arg7[%c6, %c0_13] : memref<16x128xf32, #tpu.memory_space<vmem>>, vector<1x128xf32>
    tpu.vector_store %arg7[%c6, %c0_13], %41 {strides = array<i32>} : memref<16x128xf32, #tpu.memory_space<vmem>>, vector<1x128xf32>,
    %c7_i32 = arith.constant 7 : i32
    %43 = arith.addi %0, %c7_i32 : i32
    %44 = arith.index_cast %43 : i32 to index
    %45 = memref.load %arg1[%44] : memref<16xi32, #tpu.memory_space<smem>>
    %46 = arith.index_cast %45 : i32 to index
    %c0_14 = arith.constant 0 : index
    %47 = vector.load %arg3[%46, %c0_14] : memref<128x128xf32, #tpu.memory_space<vmem>>, vector<1x128xf32>
    %c7 = arith.constant 7 : index
    %c0_15 = arith.constant 0 : index
    %48 = vector.load %arg7[%c7, %c0_15] : memref<16x128xf32, #tpu.memory_space<vmem>>, vector<1x128xf32>
    tpu.vector_store %arg7[%c7, %c0_15], %47 {strides = array<i32>} : memref<16x128xf32, #tpu.memory_space<vmem>>, vector<1x128xf32>,
    %c8_i32 = arith.constant 8 : i32
    %49 = arith.addi %0, %c8_i32 : i32
    %50 = arith.index_cast %49 : i32 to index
    %51 = memref.load %arg1[%50] : memref<16xi32, #tpu.memory_space<smem>>
    %52 = arith.index_cast %51 : i32 to index
    %c0_16 = arith.constant 0 : index
    %53 = vector.load %arg3[%52, %c0_16] : memref<128x128xf32, #tpu.memory_space<vmem>>, vector<1x128xf32>
    %c8 = arith.constant 8 : index
    %c0_17 = arith.constant 0 : index
    %54 = vector.load %arg7[%c8, %c0_17] : memref<16x128xf32, #tpu.memory_space<vmem>>, vector<1x128xf32>
    tpu.vector_store %arg7[%c8, %c0_17], %53 {strides = array<i32>} : memref<16x128xf32, #tpu.memory_space<vmem>>, vector<1x128xf32>,
    %c9_i32 = arith.constant 9 : i32
    %55 = arith.addi %0, %c9_i32 : i32
    %56 = arith.index_cast %55 : i32 to index
    %57 = memref.load %arg1[%56] : memref<16xi32, #tpu.memory_space<smem>>
    %58 = arith.index_cast %57 : i32 to index
    %c0_18 = arith.constant 0 : index
    %59 = vector.load %arg3[%58, %c0_18] : memref<128x128xf32, #tpu.memory_space<vmem>>, vector<1x128xf32>
    %c9 = arith.constant 9 : index
    %c0_19 = arith.constant 0 : index
    %60 = vector.load %arg7[%c9, %c0_19] : memref<16x128xf32, #tpu.memory_space<vmem>>, vector<1x128xf32>
    tpu.vector_store %arg7[%c9, %c0_19], %59 {strides = array<i32>} : memref<16x128xf32, #tpu.memory_space<vmem>>, vector<1x128xf32>,
    %c10_i32 = arith.constant 10 : i32
    %61 = arith.addi %0, %c10_i32 : i32
    %62 = arith.index_cast %61 : i32 to index
    %63 = memref.load %arg1[%62] : memref<16xi32, #tpu.memory_space<smem>>
    %64 = arith.index_cast %63 : i32 to index
    %c0_20 = arith.constant 0 : index
    %65 = vector.load %arg3[%64, %c0_20] : memref<128x128xf32, #tpu.memory_space<vmem>>, vector<1x128xf32>
    %c10 = arith.constant 10 : index
    %c0_21 = arith.constant 0 : index
    %66 = vector.load %arg7[%c10, %c0_21] : memref<16x128xf32, #tpu.memory_space<vmem>>, vector<1x128xf32>
    tpu.vector_store %arg7[%c10, %c0_21], %65 {strides = array<i32>} : memref<16x128xf32, #tpu.memory_space<vmem>>, vector<1x128xf32>,
    %c11_i32 = arith.constant 11 : i32
    %67 = arith.addi %0, %c11_i32 : i32
    %68 = arith.index_cast %67 : i32 to index
    %69 = memref.load %arg1[%68] : memref<16xi32, #tpu.memory_space<smem>>
    %70 = arith.index_cast %69 : i32 to index
    %c0_22 = arith.constant 0 : index
    %71 = vector.load %arg3[%70, %c0_22] : memref<128x128xf32, #tpu.memory_space<vmem>>, vector<1x128xf32>
    %c11 = arith.constant 11 : index
    %c0_23 = arith.constant 0 : index
    %72 = vector.load %arg7[%c11, %c0_23] : memref<16x128xf32, #tpu.memory_space<vmem>>, vector<1x128xf32>
    tpu.vector_store %arg7[%c11, %c0_23], %71 {strides = array<i32>} : memref<16x128xf32, #tpu.memory_space<vmem>>, vector<1x128xf32>,
    %c12_i32 = arith.constant 12 : i32
    %73 = arith.addi %0, %c12_i32 : i32
    %74 = arith.index_cast %73 : i32 to index
    %75 = memref.load %arg1[%74] : memref<16xi32, #tpu.memory_space<smem>>
    %76 = arith.index_cast %75 : i32 to index
    %c0_24 = arith.constant 0 : index
    %77 = vector.load %arg3[%76, %c0_24] : memref<128x128xf32, #tpu.memory_space<vmem>>, vector<1x128xf32>
    %c12 = arith.constant 12 : index
    %c0_25 = arith.constant 0 : index
    %78 = vector.load %arg7[%c12, %c0_25] : memref<16x128xf32, #tpu.memory_space<vmem>>, vector<1x128xf32>
    tpu.vector_store %arg7[%c12, %c0_25], %77 {strides = array<i32>} : memref<16x128xf32, #tpu.memory_space<vmem>>, vector<1x128xf32>,
    %c13_i32 = arith.constant 13 : i32
    %79 = arith.addi %0, %c13_i32 : i32
    %80 = arith.index_cast %79 : i32 to index
    %81 = memref.load %arg1[%80] : memref<16xi32, #tpu.memory_space<smem>>
    %82 = arith.index_cast %81 : i32 to index
    %c0_26 = arith.constant 0 : index
    %83 = vector.load %arg3[%82, %c0_26] : memref<128x128xf32, #tpu.memory_space<vmem>>, vector<1x128xf32>
    %c13 = arith.constant 13 : index
    %c0_27 = arith.constant 0 : index
    %84 = vector.load %arg7[%c13, %c0_27] : memref<16x128xf32, #tpu.memory_space<vmem>>, vector<1x128xf32>
    tpu.vector_store %arg7[%c13, %c0_27], %83 {strides = array<i32>} : memref<16x128xf32, #tpu.memory_space<vmem>>, vector<1x128xf32>,
    %c14_i32 = arith.constant 14 : i32
    %85 = arith.addi %0, %c14_i32 : i32
    %86 = arith.index_cast %85 : i32 to index
    %87 = memref.load %arg1[%86] : memref<16xi32, #tpu.memory_space<smem>>
    %88 = arith.index_cast %87 : i32 to index
    %c0_28 = arith.constant 0 : index
    %89 = vector.load %arg3[%88, %c0_28] : memref<128x128xf32, #tpu.memory_space<vmem>>, vector<1x128xf32>
    %c14 = arith.constant 14 : index
    %c0_29 = arith.constant 0 : index
    %90 = vector.load %arg7[%c14, %c0_29] : memref<16x128xf32, #tpu.memory_space<vmem>>, vector<1x128xf32>
    tpu.vector_store %arg7[%c14, %c0_29], %89 {strides = array<i32>} : memref<16x128xf32, #tpu.memory_space<vmem>>, vector<1x128xf32>,
    %c15_i32 = arith.constant 15 : i32
    %91 = arith.addi %0, %c15_i32 : i32
    %92 = arith.index_cast %91 : i32 to index
    %93 = memref.load %arg1[%92] : memref<16xi32, #tpu.memory_space<smem>>
    %94 = arith.index_cast %93 : i32 to index
    %c0_30 = arith.constant 0 : index
    %95 = vector.load %arg3[%94, %c0_30] : memref<128x128xf32, #tpu.memory_space<vmem>>, vector<1x128xf32>
    %c15 = arith.constant 15 : index
    %c0_31 = arith.constant 0 : index
    %96 = vector.load %arg7[%c15, %c0_31] : memref<16x128xf32, #tpu.memory_space<vmem>>, vector<1x128xf32>
    tpu.vector_store %arg7[%c15, %c0_31], %95 {strides = array<i32>} : memref<16x128xf32, #tpu.memory_space<vmem>>, vector<1x128xf32>,
    %c0_32 = arith.constant 0 : index
    %c0_33 = arith.constant 0 : index
    %97 = vector.load %arg7[%c0_32, %c0_33] : memref<16x128xf32, #tpu.memory_space<vmem>>, vector<16x128xf32>
    %c0_34 = arith.constant 0 : index
    %c0_35 = arith.constant 0 : index
    %98 = vector.load %arg4[%c0_34, %c0_35] : memref<16x128xf32, #tpu.memory_space<vmem>>, vector<16x128xf32>
    %99 = arith.addf %97, %98 : vector<16x128xf32>
    %c0_36 = arith.constant 0 : index
    %c0_37 = arith.constant 0 : index
    %100 = vector.load %arg5[%c0_36, %c0_37] : memref<16x128xf32, #tpu.memory_space<vmem>>, vector<16x128xf32>
    tpu.vector_store %arg5[%c0_36, %c0_37], %99 {strides = array<i32>} : memref<16x128xf32, #tpu.memory_space<vmem>>, vector<16x128xf32>,
    %cst = arith.constant dense<0xFF800000> : vector<16xf32>
    %101 = vector.multi_reduction <maximumf>, %99, %cst [1] : vector<16x128xf32> to vector<16xf32>
    %102 = vector.shape_cast %101 : vector<16xf32> to vector<16x1xf32>
    %103 = vector.broadcast %102 : vector<16x1xf32> to vector<16x128xf32>
    %104 = arith.subf %99, %103 : vector<16x128xf32>
    %105 = math.exp %104 : vector<16x128xf32>
    %cst_38 = arith.constant dense<0.000000e+00> : vector<16xf32>
    %106 = vector.multi_reduction <add>, %105, %cst_38 [1] : vector<16x128xf32> to vector<16xf32>
    %107 = vector.shape_cast %106 : vector<16xf32> to vector<16x1xf32>
    %108 = math.log %107 : vector<16x1xf32>
    %109 = arith.addf %108, %102 : vector<16x1xf32>
    %110 = tpu.iota {dimensions = array<i32: 1>} : vector<16x128xi32>
    %c0_39 = arith.constant 0 : index
    %c0_40 = arith.constant 0 : index
    %111 = vector.load %arg2[%c0_39, %c0_40] : memref<16x1xi32, #tpu.memory_space<vmem>>, vector<16x1xi32>
    %112 = vector.broadcast %111 : vector<16x1xi32> to vector<16x128xi32>
    %113 = arith.cmpi eq, %110, %112 : vector<16x128xi32>
    %cst_41 = arith.constant 0.000000e+00 : f32
    %114 = vector.broadcast %cst_41 : f32 to vector<16x128xf32>
    %115 = arith.select %113, %99, %114 : vector<16x128xi1>, vector<16x128xf32>
    %cst_42 = arith.constant dense<0.000000e+00> : vector<16xf32>
    %116 = vector.multi_reduction <add>, %115, %cst_42 [1] : vector<16x128xf32> to vector<16xf32>
    %117 = vector.shape_cast %116 : vector<16xf32> to vector<16x1xf32>
    %118 = arith.subf %109, %117 : vector<16x1xf32>
    %cst_43 = arith.constant dense<0.000000e+00> : vector<1xf32>
    %119 = vector.multi_reduction <add>, %118, %cst_43 [0] : vector<16x1xf32> to vector<1xf32>
    %120 = vector.shape_cast %119 : vector<1xf32> to vector<1x1xf32>
    %c0_44 = arith.constant 0 : index
    %c0_45 = arith.constant 0 : index
    %121 = vector.load %arg6[%c0_44, %c0_45] : memref<1x1xf32, #tpu.memory_space<vmem>>, vector<1x1xf32>
    tpu.vector_store %arg6[%c0_44, %c0_45], %120 {strides = array<i32>} : memref<1x1xf32, #tpu.memory_space<vmem>>, vector<1x1xf32>,
    return
  }
  func.func @transform_0(%arg0: i32, %arg1: memref<16xi32, #tpu.memory_space<smem>>) -> (i32, i32) {
    %c0_i32 = arith.constant 0 : i32
    %c0_i32_0 = arith.constant 0 : i32
    return %arg0, %c0_i32 : i32, i32
  }
  func.func @transform_1(%arg0: i32, %arg1: memref<16xi32, #tpu.memory_space<smem>>) -> (i32, i32) {
    %c0_i32 = arith.constant 0 : i32
    %c0_i32_0 = arith.constant 0 : i32
    %c0_i32_1 = arith.constant 0 : i32
    return %c0_i32, %c0_i32_0 : i32, i32
  }
  func.func @transform_2(%arg0: i32, %arg1: memref<16xi32, #tpu.memory_space<smem>>) -> (i32, i32) {
    %c0_i32 = arith.constant 0 : i32
    %c0_i32_0 = arith.constant 0 : i32
    %c0_i32_1 = arith.constant 0 : i32
    return %c0_i32, %c0_i32_0 : i32, i32
  }
  func.func @transform_3(%arg0: i32, %arg1: memref<16xi32, #tpu.memory_space<smem>>) -> (i32, i32) {
    %c0_i32 = arith.constant 0 : i32
    %c0_i32_0 = arith.constant 0 : i32
    return %arg0, %c0_i32 : i32, i32
  }
  func.func @transform_4(%arg0: i32, %arg1: memref<16xi32, #tpu.memory_space<smem>>) -> (i32, i32) {
    %c0_i32 = arith.constant 0 : i32
    %c0_i32_0 = arith.constant 0 : i32
    return %arg0, %c0_i32 : i32, i32
  }
}

</mosaic_0001>

<llo_original>
// kernel: tpu_custom_call.1
$region0: #{tpu_custom_call.1}
  #allocation0 [shape = 'u32[]', space=smem, size = 0x4, offset = 0x4, fixed_abs, tag = 'smem constant byte address 0x4 - core index']
  #allocation1 [shape = 'u32[144,128]{1,0:T(1,128)}', space=vmem, size = 0x12000, scoped, tag = 'internal scratch']
  #allocation2 [shape = 'f32[16,128]{1,0:T(8,128)}', space=vmem, size = 0x2000, scoped, tag = 'scratch operand']
  #allocation3 [shape = 's32[1]{0}', space=sflag, size = 0x4, scoped, tag = 'scoped memory for tpu_custom_call.1']
  #allocation4 [shape = 'u8[512]{0}', space=smem, size = 0x200, scoped, tag = 'prefetched SMEM operand 0']
  %s0 = inlined_call_operand.vmem [shape: s32[16], index: 0, kind: input, shape index: {}]
  %s1 = inlined_call_operand.vmem [shape: s32[16,1], index: 1, kind: input, shape index: {}]
  %s2 = inlined_call_operand.hbm [shape: f32[128,128], index: 2, kind: input, shape index: {}]
  %s3 = inlined_call_operand.vmem [shape: f32[16,128], index: 3, kind: input, shape index: {}]
  %s4 = inlined_call_operand.hbm [shape: f32[16,128], index: 4, kind: output, shape index: {0}]
  %s5 = inlined_call_operand.hbm [shape: f32[1,1], index: 5, kind: output, shape index: {1}]
  %6 = xla_tuple %s4, %s5
  %s7 = sld [smem:[#allocation0]]
  $region34: #{tpu_custom_call.1} parent=0
    _
  %s9 = ssub.s32 1, %s7
  %s10 = scalar_select 0, %s9, %s7
  %s11 = sshll.u32 %s0, 4
  %s12 = int_to_ptr.vmem [resolvable:$true] %s11
  %14 = dma.vmem_to_smem %s12, 16, [#allocation4], [#allocation3]
  %15 = dma.done [#allocation3], 16
  %16 = sfence
  $region1: #{tpu_custom_call.1} parent=0
    #allocation5 [shape = 'u8[65536]{0}', space=vmem, size = 0x10000, scoped, tag = 'input window, operand 2, single buffered']
    #allocation6 [shape = 's32[1]{0}', space=sflag, size = 0x4, scoped, tag = 'scoped memory for tpu_custom_call.1']
    #allocation7 [shape = 's32[1]{0}', space=sflag, size = 0x4, scoped, tag = 'scoped memory for tpu_custom_call.1']
    #allocation8 [shape = 'u8[8192]{0}', space=vmem, size = 0x2000, scoped, tag = 'output window, operand 0, single buffered']
    #allocation9 [shape = 'u8[512]{0}', space=vmem, size = 0x400, scoped, tag = 'output window, operand 1, single buffered']
    #allocation10 [shape = 's32[1]{0}', space=sflag, size = 0x4, scoped, tag = 'scoped memory for tpu_custom_call.1']
    %17 = vsyncpa [#allocation6], 0
    %18 = vsyncpa [#allocation7], 0
    %19 = vsyncpa [#allocation10], 0
    // Predicated region
    $region2: #{tpu_custom_call.1} parent=1 // pred_check
      _
    $region3: #{tpu_custom_call.1} parent=1 // pred_check_branch
      %21 = sbr.rel (0) target = $region5
    $region4: #{tpu_custom_call.1} parent=1 // pred_region
      _
    $region5: #{tpu_custom_call.1} parent=1 // pred_fallthru
      _
    // Predicated region
    $region6: #{tpu_custom_call.1} parent=1 // pred_check
      _
    $region7: #{tpu_custom_call.1} parent=1 // pred_check_branch
      %23 = sbr.rel (0) target = $region9
    $region8: #{tpu_custom_call.1} parent=1 // pred_region
      %s25 = ssub.s32 2048, 2048
      %26 = vsyncadd [#allocation6], %s25
      %s27 = sshll.u32 [#allocation5], 4
      %s28 = int_to_ptr.vmem [resolvable:$true] %s27
      %33 = dma.hbm_to_vmem [thread:$0]  %s2, 2048, %s28, [#allocation6], 128, 128, 8
    $region9: #{tpu_custom_call.1} parent=1 // pred_fallthru
      _
    // Predicated region
    $region10: #{tpu_custom_call.1} parent=1 // pred_check
      _
    $region11: #{tpu_custom_call.1} parent=1 // pred_check_branch
      %35 = sbr.rel (0) target = $region13
    $region12: #{tpu_custom_call.1} parent=1 // pred_region
      _
    $region13: #{tpu_custom_call.1} parent=1 // pred_fallthru
      _
    // Predicated region
    $region14: #{tpu_custom_call.1} parent=1 // pred_check
      _
    $region15: #{tpu_custom_call.1} parent=1 // pred_check_branch
      %37 = sbr.rel (0) target = $region17
    $region16: #{tpu_custom_call.1} parent=1 // pred_region
      %38 = dma.done [#allocation6], 2048
    $region17: #{tpu_custom_call.1} parent=1 // pred_fallthru
      _
    %s39 = smul.u32 0, 16
    %s40 = sld [smem:[#allocation4 + %s39]]
    %s41 = scalar_lea.vmem [#allocation5], %s40
    %v42 = vld [vmem:[%s41] sm:$0x1]
    %43 = vst [vmem:[#allocation2] sm:$0x1] %v42
    %s44 = sadd.s32 %s39, 1
    %s45 = sld [smem:[#allocation4 + %s44]]
    %s46 = scalar_lea.vmem [#allocation5], %s45
    %v47 = vld [vmem:[%s46] sm:$0x1]
    %48 = vst [vmem:[#allocation2 + $0x1] sm:$0x1] %v47
    %s49 = sadd.s32 %s39, 2
    %s50 = sld [smem:[#allocation4 + %s49]]
    %s51 = scalar_lea.vmem [#allocation5], %s50
    %v52 = vld [vmem:[%s51] sm:$0x1]
    %53 = vst [vmem:[#allocation2 + $0x2] sm:$0x1] %v52
    %s54 = sadd.s32 %s39, 3
    %s55 = sld [smem:[#allocation4 + %s54]]
    %s56 = scalar_lea.vmem [#allocation5], %s55
    %v57 = vld [vmem:[%s56] sm:$0x1]
    %58 = vst [vmem:[#allocation2 + $0x3] sm:$0x1] %v57
    %s59 = sadd.s32 %s39, 4
    %s60 = sld [smem:[#allocation4 + %s59]]
    %s61 = scalar_lea.vmem [#allocation5], %s60
    %v62 = vld [vmem:[%s61] sm:$0x1]
    %63 = vst [vmem:[#allocation2 + $0x4] sm:$0x1] %v62
    %s64 = sadd.s32 %s39, 5
    %s65 = sld [smem:[#allocation4 + %s64]]
    %s66 = scalar_lea.vmem [#allocation5], %s65
    %v67 = vld [vmem:[%s66] sm:$0x1]
    %68 = vst [vmem:[#allocation2 + $0x5] sm:$0x1] %v67
    %s69 = sadd.s32 %s39, 6
    %s70 = sld [smem:[#allocation4 + %s69]]
    %s71 = scalar_lea.vmem [#allocation5], %s70
    %v72 = vld [vmem:[%s71] sm:$0x1]
    %73 = vst [vmem:[#allocation2 + $0x6] sm:$0x1] %v72
    %s74 = sadd.s32 %s39, 7
    %s75 = sld [smem:[#allocation4 + %s74]]
    %s76 = scalar_lea.vmem [#allocation5], %s75
    %v77 = vld [vmem:[%s76] sm:$0x1]
    %78 = vst [vmem:[#allocation2 + $0x7] sm:$0x1] %v77
    %s79 = sadd.s32 %s39, 8
    %s80 = sld [smem:[#allocation4 + %s79]]
    %s81 = scalar_lea.vmem [#allocation5], %s80
    %v82 = vld [vmem:[%s81] sm:$0x1]
    %83 = vst [vmem:[#allocation2 + $0x8] sm:$0x1] %v82
    %s84 = sadd.s32 %s39, 9
    %s85 = sld [smem:[#allocation4 + %s84]]
    %s86 = scalar_lea.vmem [#allocation5], %s85
    %v87 = vld [vmem:[%s86] sm:$0x1]
    %88 = vst [vmem:[#allocation2 + $0x9] sm:$0x1] %v87
    %s89 = sadd.s32 %s39, 10
    %s90 = sld [smem:[#allocation4 + %s89]]
    %s91 = scalar_lea.vmem [#allocation5], %s90
    %v92 = vld [vmem:[%s91] sm:$0x1]
    %93 = vst [vmem:[#allocation2 + $0xa] sm:$0x1] %v92
    %s94 = sadd.s32 %s39, 11
    %s95 = sld [smem:[#allocation4 + %s94]]
    %s96 = scalar_lea.vmem [#allocation5], %s95
    %v97 = vld [vmem:[%s96] sm:$0x1]
    %98 = vst [vmem:[#allocation2 + $0xb] sm:$0x1] %v97
    %s99 = sadd.s32 %s39, 12
    %s100 = sld [smem:[#allocation4 + %s99]]
    %s101 = scalar_lea.vmem [#allocation5], %s100
    %v102 = vld [vmem:[%s101] sm:$0x1]
    %103 = vst [vmem:[#allocation2 + $0xc] sm:$0x1] %v102
    %s104 = sadd.s32 %s39, 13
    %s105 = sld [smem:[#allocation4 + %s104]]
    %s106 = scalar_lea.vmem [#allocation5], %s105
    %v107 = vld [vmem:[%s106] sm:$0x1]
    %108 = vst [vmem:[#allocation2 + $0xd] sm:$0x1] %v107
    %s109 = sadd.s32 %s39, 14
    %s110 = sld [smem:[#allocation4 + %s109]]
    %s111 = scalar_lea.vmem [#allocation5], %s110
    %v112 = vld [vmem:[%s111] sm:$0x1]
    %113 = vst [vmem:[#allocation2 + $0xe] sm:$0x1] %v112
    %s114 = sadd.s32 %s39, 15
    %s115 = sld [smem:[#allocation4 + %s114]]
    %s116 = scalar_lea.vmem [#allocation5], %s115
    %v117 = vld [vmem:[%s116] sm:$0x1]
    %118 = vst [vmem:[#allocation2 + $0xf] sm:$0x1] %v117
    %v119 = vld [vmem:[#allocation2] sm:$0xff]
    %v120 = vld [vmem:[#allocation2 + $0x8] sm:$0xff]
    %v121 = vld [vmem:[%s3] sm:$0xff]
    %v122 = vld [vmem:[%s3 + $0x8] sm:$0xff]
    %v123 = vadd.f32 %v119, %v121
    %v124 = vadd.f32 %v120, %v122
    %125 = vst [vmem:[#allocation8] sm:$0xff] %v123
    %126 = vst [vmem:[#allocation8 + $0x8] sm:$0xff] %v124
    %127 = vmax.xlane.f32.xlu0 %v123
    %v128 = vpop.xlane.xlu0 %127
    %129 = vmax.xlane.f32.xlu0 %v124
    %v130 = vpop.xlane.xlu0 %129
    %v131 = vsub.f32 %v123, %v128
    %v132 = vsub.f32 %v124, %v130
    %v133 = vmul.f32 %v131, 1.442695
    %v134 = vpow.pop %v133
    %v135 = vmul.f32 %v132, 1.442695
    %v136 = vpow.pop %v135
    %137 = vadd.xlane.f32.xlu0 %v134
    %v138 = vpop.xlane.xlu0 %137
    %139 = vadd.xlane.f32.xlu0 %v136
    %v140 = vpop.xlane.xlu0 %139
    %v141 = vlog2.pop %v138
    %v142 = vmul.f32 %v141, 0.6931472
    %v143 = vlog2.pop %v140
    %v144 = vmul.f32 %v143, 0.6931472
    %v145 = vadd.f32 %v142, %v128
    %v146 = vadd.f32 %v144, %v130
    %v147 = vlaneseq
    %v148 = vand.u32 %v147, 127
    %v149 = vld [vmem:[%s1] sm:$0xff]
    %v150 = vld [vmem:[%s1 + $0x8] sm:$0xff]
    %151 = vset.pattern.permute.xlu0 0
    %152 = vperm.xlu0 %151, %v149
    %v153 = vpop.permute.xlu0 %152
    %154 = vset.pattern.permute.xlu0 0
    %155 = vperm.xlu0 %154, %v150
    %v156 = vpop.permute.xlu0 %155
    %vm157 = vcmp.eq.s32.totalorder %v148, %v153
    %vm158 = vcmp.eq.s32.totalorder %v148, %v156
    %v159 = vsel %vm157, %v123, 0.0
    %v160 = vsel %vm158, %v124, 0.0
    %161 = vadd.xlane.f32.xlu0 %v159
    %v162 = vpop.xlane.xlu0 %161
    %163 = vadd.xlane.f32.xlu0 %v160
    %v164 = vpop.xlane.xlu0 %163
    %v165 = vsub.f32 %v145, %v162
    %v166 = vsub.f32 %v146, %v164
    %v167 = vadd.f32 %v165, %v166
    %v168 = vrot.slane %v167, 4
    %v169 = vadd.f32 %v167, %v168
    %v170 = vrot.slane %v169, 2
    %v171 = vadd.f32 %v169, %v170
    %v172 = vrot.slane %v171, 1
    %v173 = vadd.f32 %v171, %v172
    %vm174 = vcmask 0
    %175 = vst.msk [vmem:[#allocation9] sm:$0x1] %vm174, %v173
    // Predicated region
    $region18: #{tpu_custom_call.1} parent=1 // pred_check
      _
    $region19: #{tpu_custom_call.1} parent=1 // pred_check_branch
      %177 = sbr.rel (0) target = $region21
    $region20: #{tpu_custom_call.1} parent=1 // pred_region
      %s179 = ssub.s32 256, 256
      %180 = vsyncadd [#allocation7], %s179
      %s181 = sshll.u32 [#allocation8], 4
      %s182 = int_to_ptr.vmem [resolvable:$true] %s181
      %187 = dma.vmem_to_hbm [thread:$0]  %s182, 256, %s4, [#allocation7], 128, 128, 8
    $region21: #{tpu_custom_call.1} parent=1 // pred_fallthru
      _
    // Predicated region
    $region22: #{tpu_custom_call.1} parent=1 // pred_check
      _
    $region23: #{tpu_custom_call.1} parent=1 // pred_check_branch
      %189 = sbr.rel (0) target = $region25
    $region24: #{tpu_custom_call.1} parent=1 // pred_region
      %s191 = ssub.s32 16, 16
      %192 = vsyncadd [#allocation10], %s191
      %s194 = sshll.u32 [#allocation9], 4
      %s195 = int_to_ptr.vmem [resolvable:$true] %s194
      %197 = dma.vmem_to_hbm [thread:$0]  %s195, 16, %s5, [#allocation10]
    $region25: #{tpu_custom_call.1} parent=1 // pred_fallthru
      _
    // Predicated region
    $region26: #{tpu_custom_call.1} parent=1 // pred_check
      _
    $region27: #{tpu_custom_call.1} parent=1 // pred_check_branch
      %199 = sbr.rel (0) target = $region29
    $region28: #{tpu_custom_call.1} parent=1 // pred_region
      %200 = dma.done [#allocation7], 256
    $region29: #{tpu_custom_call.1} parent=1 // pred_fallthru
      _
    // Predicated region
    $region30: #{tpu_custom_call.1} parent=1 // pred_check
      _
    $region31: #{tpu_custom_call.1} parent=1 // pred_check_branch
      %202 = sbr.rel (0) target = $region33
    $region32: #{tpu_custom_call.1} parent=1 // pred_region
      %203 = dma.done [#allocation10], 16
    $region33: #{tpu_custom_call.1} parent=1 // pred_fallthru
      _
    %204 = vsyncpa [#allocation6], 1
    %205 = vsyncpa [#allocation7], 1
    %206 = vsyncpa [#allocation10], 1

</llo_original>
